<compile_context>
chip_gen: v5e
topology: v5e:2x2
jax: 0.10.0
libtpu: 0.0.40
codegen_flags: <defaults>
</compile_context>

<pallas_src>
import functools

import jax
import jax.numpy as jnp
from jax import lax
from jax.experimental import pallas as pl
from jax.experimental.pallas import tpu as pltpu

BN_EPS = 1e-5


def _round_up(x, m):
    return -(-x // m) * m


# --------------------------------------------------------------------------- #
# Pallas kernels
# --------------------------------------------------------------------------- #
def _conv_stats_kernel(p_ref, w_ref, y_ref, stat_ref, *, hw, tile):
    """Conv tile + per-tile per-channel (sum, centered M2) stats.

    p_ref:    (K, T)    bf16 patches tile (zero-padded cols beyond `hw`)
    w_ref:    (Cout, K) bf16 weights
    y_ref:    (Cout, T) bf16 unnormalized conv output (re-read by pass B)
    stat_ref: (Cout, 2) f32  -> [:, 0] = sum, [:, 1] = sum((x - tile_mean)^2)
    """
    t_idx = pl.program_id(1)
    acc = jnp.dot(w_ref[...], p_ref[...],
                  preferred_element_type=jnp.float32)          # (Cout, T) f32
    y_ref[...] = acc.astype(y_ref.dtype)

    # Padded columns are exactly zero in `acc` (zero patches, no bias), so they
    # do not perturb the raw sum; they ARE masked out of the centered M2.
    col = lax.broadcasted_iota(jnp.int32, acc.shape, 1) + t_idx * tile
    valid = col < hw
    n_valid = jnp.minimum(tile, hw - t_idx * tile).astype(jnp.float32)

    s = jnp.sum(acc, axis=1, keepdims=True)                    # (Cout, 1)
    mu = s / n_valid
    d = jnp.where(valid, acc - mu, 0.0)
    stat_ref[:, 0:1] = s
    stat_ref[:, 1:2] = jnp.sum(d * d, axis=1, keepdims=True)


def _apply_kernel(y_ref, scale_ref, shift_ref, o_ref):
    """Folded BN affine + ReLU on the bf16 conv intermediate (lane-dense)."""
    y = y_ref[...].astype(jnp.float32)                         # (Cout, T)
    o_ref[...] = jnp.maximum(y * scale_ref[...] + shift_ref[...], 0.0)


# --------------------------------------------------------------------------- #
# Wrapper
# --------------------------------------------------------------------------- #
@functools.partial(jax.jit, static_argnames=("stride", "tile_hw"))
def conv2d_block(x_nchw, w_oihw, bias, gamma, beta, *, stride=1, tile_hw=1024):
    """Forward pass of Conv2dBlock.  x: (N, Cin, H, W), weight OIHW.
    Returns (N, Cout, Ho, Wo) f32."""
    del bias  # exactly cancelled by the batch-mean subtraction of train-mode BN

    cout, cin, kh, kw = w_oihw.shape
    n, _, h, w_in = x_nchw.shape
    ho = (h - kh) // stride + 1
    wo = (w_in - kw) // stride + 1
    hw = ho * wo
    k = kh * kw * cin
    k_pad = _round_up(k, 16)                 # bf16 sublane tile (zero taps)

    # ---- tile selection + VMEM budgeting (v5e 16 MiB scoped default, v7x 64
    # MiB physical) ----------------------------------------------------------
    tile_hw = max(128, min(tile_hw, _round_up(hw, 128)))
    assert tile_hw % 128 == 0

    def _vmem_a(t):   # double-buffered patch + weight + y + stat blocks
        return 2 * (2 * k_pad * t) + 2 * (2 * cout * t) \
            + 2 * (2 * cout * k_pad) + 2 * (8 * cout)

    def _vmem_b(t):   # double-buffered y in + f32 out + scale/shift
        return 2 * (2 * cout * t) + 2 * (4 * cout * t) + 4 * (4 * cout)

    while tile_hw > 128 and _vmem_a(tile_hw) > 40 * 2**20:
        tile_hw //= 2

    hw_pad = _round_up(hw, tile_hw)
    n_tiles = hw_pad // tile_hw

    vmem_limit = int(min(max(2 * max(_vmem_a(tile_hw), _vmem_b(tile_hw)),
                             16 * 2**20), 48 * 2**20))
    cparams = pltpu.CompilerParams(
        dimension_semantics=("parallel", "parallel"),
        vmem_limit_bytes=vmem_limit)

    # ---- wrapper-side im2col: bf16 from the start, per-image, zero-padded ---
    # TODO(synk): build the patches on-chip (shifted matmuls + halo DMA) and
    # drop this 9x-expanded HBM intermediate entirely.
    x_bf = x_nchw.astype(jnp.bfloat16)
    taps = []
    for i in range(kh):
        for j in range(kw):
            taps.append(x_bf[:, :, i:i + (ho - 1) * stride + 1:stride,
                                    j:j + (wo - 1) * stride + 1:stride])
    p = jnp.stack(taps, axis=1).reshape(n, k, hw)          # (N, K, HW) bf16
    p = jnp.pad(p, ((0, 0), (0, k_pad - k), (0, hw_pad - hw)))

    # weights as (Cout, K) with K ordered (tap, cin) to match the patches.
    w_t = jnp.transpose(w_oihw, (0, 2, 3, 1)).reshape(cout, k)
    w_t = jnp.pad(w_t, ((0, 0), (0, k_pad - k))).astype(jnp.bfloat16)

    mm_flops = 2 * n * hw_pad * k_pad * cout
    patch_bytes = 2 * n * k_pad * hw_pad
    y_bytes = 2 * n * cout * hw_pad

    # ---- pass A: conv (bf16 intermediate) + per-tile centered stats ---------
    y_bf, stats = pl.pallas_call(
        functools.partial(_conv_stats_kernel, hw=hw, tile=tile_hw),
        out_shape=(jax.ShapeDtypeStruct((n, cout, hw_pad), jnp.bfloat16),
                   jax.ShapeDtypeStruct((n, n_tiles, cout, 2), jnp.float32)),
        grid=(n, n_tiles),
        in_specs=[pl.BlockSpec((None, k_pad, tile_hw), lambda b, t: (b, 0, t)),
                  pl.BlockSpec((cout, k_pad), lambda b, t: (0, 0))],
        out_specs=(pl.BlockSpec((None, cout, tile_hw), lambda b, t: (b, 0, t)),
                   pl.BlockSpec((None, None, cout, 2),
                                lambda b, t: (b, t, 0, 0))),
        compiler_params=cparams,
        cost_estimate=pl.CostEstimate(
            flops=int(mm_flops + 4 * n * hw_pad * cout), transcendentals=0,
            bytes_accessed=int(patch_bytes + 2 * cout * k_pad + y_bytes
                               + 8 * n * n_tiles * cout)),
    )(p, w_t)

    # ---- tiny global combine (Chan's parallel variance) + BN affine fold ----
    counts = jnp.asarray([min(tile_hw, hw - t * tile_hw) for t in range(n_tiles)],
                         dtype=jnp.float32)                    # (n_tiles,)
    m_total = float(n * hw)
    s = stats[..., 0]                                          # (N, T, Cout)
    m2 = stats[..., 1]
    mean = jnp.sum(s, axis=(0, 1)) / m_total                   # (Cout,)
    mu_t = s / counts[None, :, None]
    var = (jnp.sum(m2, axis=(0, 1))
           + jnp.sum(counts[None, :, None] * jnp.square(mu_t - mean),
                     axis=(0, 1))) / m_total                   # biased batch var
    inv = lax.rsqrt(jnp.maximum(var, 0.0) + BN_EPS)
    g32 = gamma.astype(jnp.float32)
    scale_v = g32 * inv
    shift_v = beta.astype(jnp.float32) - mean * scale_v
    scale = scale_v.reshape(cout, 1)
    shift = shift_v.reshape(cout, 1)

    # ---- pass B: folded BN affine + ReLU (pure elementwise, lane-dense) -----
    out = pl.pallas_call(
        _apply_kernel,
        out_shape=jax.ShapeDtypeStruct((n, cout, hw_pad), jnp.float32),
        grid=(n, n_tiles),
        in_specs=[pl.BlockSpec((None, cout, tile_hw), lambda b, t: (b, 0, t)),
                  pl.BlockSpec((cout, 1), lambda b, t: (0, 0)),
                  pl.BlockSpec((cout, 1), lambda b, t: (0, 0))],
        out_specs=pl.BlockSpec((None, cout, tile_hw), lambda b, t: (b, 0, t)),
        compiler_params=cparams,
        cost_estimate=pl.CostEstimate(
            flops=int(3 * n * hw_pad * cout), transcendentals=0,
            bytes_accessed=int(y_bytes + 4 * n * cout * hw_pad + 8 * cout)),
    )(y_bf, scale, shift)

    # Contiguous slice + free reshape (no transpose): already (N, Cout, ...).
    return out[:, :, :hw].reshape(n, cout, ho, wo)


# --------------------------------------------------------------------------- #
# Pure-JAX reference (matches PyTorch Conv2d + BatchNorm2d(train) + ReLU)
# --------------------------------------------------------------------------- #
def reference(x_nchw, w_oihw, bias, gamma, beta, *, stride=1):
    out = lax.conv_general_dilated(
        x_nchw.astype(jnp.float32), w_oihw.astype(jnp.float32),
        window_strides=(stride, stride), padding="VALID",
        dimension_numbers=("NCHW", "OIHW", "NCHW"))
    out = out + bias[None, :, None, None]
    mean = out.mean(axis=(0, 2, 3), keepdims=True)
    var = jnp.mean(jnp.square(out - mean), axis=(0, 2, 3), keepdims=True)
    out = (out - mean) * lax.rsqrt(var + BN_EPS)
    out = out * gamma[None, :, None, None] + beta[None, :, None, None]
    return jnp.maximum(out, 0.0)


if __name__ == "__main__":
    # Conv2dBlock(in_planes=4, out_planes=8, stride=1) at a small shape.
    N, CIN, H, W = 2, 4, 16, 16
    COUT, KH, KW, STRIDE = 8, 3, 3, 1

    key = jax.random.PRNGKey(0)
    kx, kw_, kb = jax.random.split(key, 3)

    x = jax.random.normal(kx, (N, CIN, H, W), dtype=jnp.float32)
    w = jax.random.normal(kw_, (COUT, CIN, KH, KW), dtype=jnp.float32) * 0.1  # OIHW
    b = jax.random.normal(kb, (COUT,), dtype=jnp.float32) * 0.1
    # BatchNorm2d parameters at PyTorch init (weight=1, bias=0).
    gamma = jnp.ones((COUT,), dtype=jnp.float32)
    beta = jnp.zeros((COUT,), dtype=jnp.float32)

    # tile_hw=128 so the small test exercises a multi-tile grid with a partial
    # last tile (HW = 14*14 = 196 -> tiles of 128 + 68 valid columns).
    out = conv2d_block(x, w, b, gamma, beta, stride=STRIDE, tile_hw=128)
    out = jax.block_until_ready(out)

    ref = jax.block_until_ready(reference(x, w, b, gamma, beta, stride=STRIDE))

    assert out.shape == (N, COUT, H - 2, W - 2), out.shape
    max_err = float(jnp.max(jnp.abs(out - ref)))
    # bf16 MXU operands + bf16 conv intermediate -> looser tolerance than f32.
    assert jnp.allclose(out, ref, rtol=2e-2, atol=2e-2), max_err

    print("KERNEL_OK")
</pallas_src>

<mosaic_0001>
module attributes {stable_mosaic.version = 11 : i64} {
  func.func @_conv_stats_kernel(%arg0: i32, %arg1: i32, %arg2: memref<1x48x128xbf16, #tpu.memory_space<vmem>>, %arg3: memref<8x48xbf16, #tpu.memory_space<vmem>>, %arg4: memref<1x8x128xbf16, #tpu.memory_space<vmem>>, %arg5: memref<1x1x8x2xf32, #tpu.memory_space<vmem>>) attributes {dimension_semantics = [#tpu.dimension_semantics<parallel>, #tpu.dimension_semantics<parallel>], iteration_bounds = array<i64: 2, 2>, scalar_prefetch = 0 : i64, scratch_operands = 0 : i64, tpu.core_type = #tpu.core_type<tc>, window_params = [{transform_indices = @transform_0, window_bounds = array<i64: 1, 48, 128>}, {pipeline_mode = #tpu.pipeline_mode<synchronous>, transform_indices = @transform_1, window_bounds = array<i64: 8, 48>}, {transform_indices = @transform_2, window_bounds = array<i64: 1, 8, 128>}, {transform_indices = @transform_3, window_bounds = array<i64: 1, 1, 8, 2>}]} {
    %c0 = arith.constant 0 : index
    %c0_0 = arith.constant 0 : index
    %0 = vector.load %arg3[%c0, %c0_0] : memref<8x48xbf16, #tpu.memory_space<vmem>>, vector<8x48xbf16>
    %c0_1 = arith.constant 0 : index
    %c0_2 = arith.constant 0 : index
    %c0_3 = arith.constant 0 : index
    %1 = vector.load %arg2[%c0_1, %c0_2, %c0_3] : memref<1x48x128xbf16, #tpu.memory_space<vmem>>, vector<1x48x128xbf16>
    %2 = vector.shape_cast %1 : vector<1x48x128xbf16> to vector<48x128xbf16>
    %cst = arith.constant dense<0.000000e+00> : vector<8x128xf32>
    %3 = tpu.matmul %0, %2, %cst {dimension_numbers = #tpu.dot_dimension_numbers<[1], [0], [0], [1], [0, 0, 1, 1], [], []>} : vector<8x48xbf16>, vector<48x128xbf16>, vector<8x128xf32> -> vector<8x128xf32>
    %4 = arith.truncf %3 : vector<8x128xf32> to vector<8x128xbf16>
    %c0_4 = arith.constant 0 : index
    %c0_5 = arith.constant 0 : index
    %c0_6 = arith.constant 0 : index
    %5 = vector.load %arg4[%c0_4, %c0_5, %c0_6] : memref<1x8x128xbf16, #tpu.memory_space<vmem>>, vector<1x8x128xbf16>
    %6 = vector.shape_cast %5 : vector<1x8x128xbf16> to vector<8x128xbf16>
    %7 = vector.shape_cast %4 : vector<8x128xbf16> to vector<1x8x128xbf16>
    tpu.vector_store %arg4[%c0_4, %c0_5, %c0_6], %7 {strides = array<i32>} : memref<1x8x128xbf16, #tpu.memory_space<vmem>>, vector<1x8x128xbf16>,
    %8 = tpu.iota {dimensions = array<i32: 1>} : vector<8x128xi32>
    %c128_i32 = arith.constant 128 : i32
    %9 = arith.muli %arg1, %c128_i32 : i32
    %10 = vector.broadcast %9 : i32 to vector<8x128xi32>
    %11 = arith.addi %8, %10 : vector<8x128xi32>
    %c196_i32 = arith.constant 196 : i32
    %12 = vector.broadcast %c196_i32 : i32 to vector<8x128xi32>
    %13 = arith.cmpi slt, %11, %12 : vector<8x128xi32>
    %c128_i32_7 = arith.constant 128 : i32
    %14 = arith.muli %arg1, %c128_i32_7 : i32
    %c196_i32_8 = arith.constant 196 : i32
    %15 = arith.subi %c196_i32_8, %14 : i32
    %c128_i32_9 = arith.constant 128 : i32
    %16 = arith.minsi %c128_i32_9, %15 : i32
    %17 = arith.sitofp %16 : i32 to f32
    %cst_10 = arith.constant dense<0.000000e+00> : vector<8xf32>
    %18 = vector.multi_reduction <add>, %3, %cst_10 [1] : vector<8x128xf32> to vector<8xf32>
    %19 = vector.shape_cast %18 : vector<8xf32> to vector<8x1xf32>
    %20 = vector.broadcast %17 : f32 to vector<8x1xf32>
    %21 = arith.divf %19, %20 : vector<8x1xf32>
    %22 = vector.broadcast %21 : vector<8x1xf32> to vector<8x128xf32>
    %23 = arith.subf %3, %22 : vector<8x128xf32>
    %cst_11 = arith.constant 0.000000e+00 : f32
    %24 = vector.broadcast %cst_11 : f32 to vector<8x128xf32>
    %25 = arith.select %13, %23, %24 : vector<8x128xi1>, vector<8x128xf32>
    %c0_12 = arith.constant 0 : index
    %c0_13 = arith.constant 0 : index
    %c0_14 = arith.constant 0 : index
    %c0_15 = arith.constant 0 : index
    %26 = vector.load %arg5[%c0_12, %c0_13, %c0_14, %c0_15] : memref<1x1x8x2xf32, #tpu.memory_space<vmem>>, vector<1x1x8x1xf32>
    %27 = vector.shape_cast %26 : vector<1x1x8x1xf32> to vector<8x1xf32>
    %28 = vector.shape_cast %19 : vector<8x1xf32> to vector<1x1x8x1xf32>
    tpu.vector_store %arg5[%c0_12, %c0_13, %c0_14, %c0_15], %28 {strides = array<i32>} : memref<1x1x8x2xf32, #tpu.memory_space<vmem>>, vector<1x1x8x1xf32>,
    %29 = arith.mulf %25, %25 : vector<8x128xf32>
    %cst_16 = arith.constant dense<0.000000e+00> : vector<8xf32>
    %30 = vector.multi_reduction <add>, %29, %cst_16 [1] : vector<8x128xf32> to vector<8xf32>
    %31 = vector.shape_cast %30 : vector<8xf32> to vector<8x1xf32>
    %c0_17 = arith.constant 0 : index
    %c0_18 = arith.constant 0 : index
    %c0_19 = arith.constant 0 : index
    %c1 = arith.constant 1 : index
    %32 = vector.load %arg5[%c0_17, %c0_18, %c0_19, %c1] : memref<1x1x8x2xf32, #tpu.memory_space<vmem>>, vector<1x1x8x1xf32>
    %33 = vector.shape_cast %32 : vector<1x1x8x1xf32> to vector<8x1xf32>
    %34 = vector.shape_cast %31 : vector<8x1xf32> to vector<1x1x8x1xf32>
    tpu.vector_store %arg5[%c0_17, %c0_18, %c0_19, %c1], %34 {strides = array<i32>} : memref<1x1x8x2xf32, #tpu.memory_space<vmem>>, vector<1x1x8x1xf32>,
    return
  }
  func.func @transform_0(%arg0: i32, %arg1: i32) -> (i32, i32, i32) {
    %c0_i32 = arith.constant 0 : i32
    %c0_i32_0 = arith.constant 0 : i32
    return %arg0, %c0_i32, %arg1 : i32, i32, i32
  }
  func.func @transform_1(%arg0: i32, %arg1: i32) -> (i32, i32) {
    %c0_i32 = arith.constant 0 : i32
    %c0_i32_0 = arith.constant 0 : i32
    %c0_i32_1 = arith.constant 0 : i32
    return %c0_i32, %c0_i32_0 : i32, i32
  }
  func.func @transform_2(%arg0: i32, %arg1: i32) -> (i32, i32, i32) {
    %c0_i32 = arith.constant 0 : i32
    %c0_i32_0 = arith.constant 0 : i32
    return %arg0, %c0_i32, %arg1 : i32, i32, i32
  }
  func.func @transform_3(%arg0: i32, %arg1: i32) -> (i32, i32, i32, i32) {
    %c0_i32 = arith.constant 0 : i32
    %c0_i32_0 = arith.constant 0 : i32
    %c0_i32_1 = arith.constant 0 : i32
    return %arg0, %arg1, %c0_i32, %c0_i32_0 : i32, i32, i32, i32
  }
}

module attributes {stable_mosaic.version = 11 : i64} {
  func.func @_apply_kernel(%arg0: i32, %arg1: i32, %arg2: memref<1x8x128xbf16, #tpu.memory_space<vmem>>, %arg3: memref<8x1xf32, #tpu.memory_space<vmem>>, %arg4: memref<8x1xf32, #tpu.memory_space<vmem>>, %arg5: memref<1x8x128xf32, #tpu.memory_space<vmem>>) attributes {dimension_semantics = [#tpu.dimension_semantics<parallel>, #tpu.dimension_semantics<parallel>], iteration_bounds = array<i64: 2, 2>, scalar_prefetch = 0 : i64, scratch_operands = 0 : i64, tpu.core_type = #tpu.core_type<tc>, window_params = [{transform_indices = @transform_0, window_bounds = array<i64: 1, 8, 128>}, {pipeline_mode = #tpu.pipeline_mode<synchronous>, transform_indices = @transform_1, window_bounds = array<i64: 8, 1>}, {pipeline_mode = #tpu.pipeline_mode<synchronous>, transform_indices = @transform_2, window_bounds = array<i64: 8, 1>}, {transform_indices = @transform_3, window_bounds = array<i64: 1, 8, 128>}]} {
    %c0 = arith.constant 0 : index
    %c0_0 = arith.constant 0 : index
    %c0_1 = arith.constant 0 : index
    %0 = vector.load %arg2[%c0, %c0_0, %c0_1] : memref<1x8x128xbf16, #tpu.memory_space<vmem>>, vector<1x8x128xbf16>
    %1 = vector.shape_cast %0 : vector<1x8x128xbf16> to vector<8x128xbf16>
    %2 = arith.extf %1 : vector<8x128xbf16> to vector<8x128xf32>
    %c0_2 = arith.constant 0 : index
    %c0_3 = arith.constant 0 : index
    %3 = vector.load %arg3[%c0_2, %c0_3] : memref<8x1xf32, #tpu.memory_space<vmem>>, vector<8x1xf32>
    %4 = vector.broadcast %3 : vector<8x1xf32> to vector<8x128xf32>
    %5 = arith.mulf %2, %4 : vector<8x128xf32>
    %c0_4 = arith.constant 0 : index
    %c0_5 = arith.constant 0 : index
    %6 = vector.load %arg4[%c0_4, %c0_5] : memref<8x1xf32, #tpu.memory_space<vmem>>, vector<8x1xf32>
    %7 = vector.broadcast %6 : vector<8x1xf32> to vector<8x128xf32>
    %8 = arith.addf %5, %7 : vector<8x128xf32>
    %cst = arith.constant 0.000000e+00 : f32
    %9 = vector.broadcast %cst : f32 to vector<8x128xf32>
    %10 = arith.maximumf %8, %9 : vector<8x128xf32>
    %c0_6 = arith.constant 0 : index
    %c0_7 = arith.constant 0 : index
    %c0_8 = arith.constant 0 : index
    %11 = vector.load %arg5[%c0_6, %c0_7, %c0_8] : memref<1x8x128xf32, #tpu.memory_space<vmem>>, vector<1x8x128xf32>
    %12 = vector.shape_cast %11 : vector<1x8x128xf32> to vector<8x128xf32>
    %13 = vector.shape_cast %10 : vector<8x128xf32> to vector<1x8x128xf32>
    tpu.vector_store %arg5[%c0_6, %c0_7, %c0_8], %13 {strides = array<i32>} : memref<1x8x128xf32, #tpu.memory_space<vmem>>, vector<1x8x128xf32>,
    return
  }
  func.func @transform_0(%arg0: i32, %arg1: i32) -> (i32, i32, i32) {
    %c0_i32 = arith.constant 0 : i32
    %c0_i32_0 = arith.constant 0 : i32
    return %arg0, %c0_i32, %arg1 : i32, i32, i32
  }
  func.func @transform_1(%arg0: i32, %arg1: i32) -> (i32, i32) {
    %c0_i32 = arith.constant 0 : i32
    %c0_i32_0 = arith.constant 0 : i32
    %c0_i32_1 = arith.constant 0 : i32
    return %c0_i32, %c0_i32_0 : i32, i32
  }
  func.func @transform_2(%arg0: i32, %arg1: i32) -> (i32, i32) {
    %c0_i32 = arith.constant 0 : i32
    %c0_i32_0 = arith.constant 0 : i32
    %c0_i32_1 = arith.constant 0 : i32
    return %c0_i32, %c0_i32_0 : i32, i32
  }
  func.func @transform_3(%arg0: i32, %arg1: i32) -> (i32, i32, i32) {
    %c0_i32 = arith.constant 0 : i32
    %c0_i32_0 = arith.constant 0 : i32
    return %arg0, %c0_i32, %arg1 : i32, i32, i32
  }
}

</mosaic_0001>

<llo_original>
// kernel: conv2d_block.3
$region0: #{conv2d_block.3}
  #allocation0 [shape = 'u32[]', space=smem, size = 0x4, offset = 0x4, fixed_abs, tag = 'smem constant byte address 0x4 - core index']
  #allocation1 [shape = 'u32[72,128]{1,0:T(1,128)}', space=vmem, size = 0x9000, scoped, tag = 'internal scratch']
  %s0 = inlined_call_operand.vmem [shape: bf16[2,8,256], index: 0, kind: input, shape index: {}]
  %s1 = inlined_call_operand.vmem [shape: f32[8,1], index: 1, kind: input, shape index: {}]
  %s2 = inlined_call_operand.vmem [shape: f32[8,1], index: 2, kind: input, shape index: {}]
  %s3 = inlined_call_operand.vmem [shape: f32[2,8,256], index: 3, kind: output, shape index: {}]
  %s4 = sld [smem:[#allocation0]]
  $region45: #{conv2d_block.3} parent=0
    _
  %s6 = ssub.s32 1, %s4
  %s7 = scalar_select 0, %s6, %s4
  loop: start=0, step=1, limit=6
  $region2: #{conv2d_block.3} parent=0 // loop_pre_header
    _
  $region3: #{conv2d_block.3} parent=0 // loop_header
    %s9 = sphi 0, %s13
    %p10 = scmp.ge.s32.totalorder %s9, 6
    %s16 = sphi 0, %s28
    %s17 = sphi 0, %s24
    %s18 = sphi 0, %s16
    %s19 = sphi 0, %s17
    %s20 = sphi 0, %s18
    %s21 = sphi 0, %s19
    %s33 = sphi 0, %s35
    %s36 = sphi 0, %s33
    %s37 = sphi 0, %s36
    %s53 = sphi 0, %s37
    %s57 = sphi 0, %s57
    %s59 = sphi 0, %s57
    %s60 = sphi 0, %s59
    %s74 = sphi 0, %s60
    %s78 = sphi 0, %s78
    %s80 = sphi 0, %s78
    %s81 = sphi 0, %s80
    %s95 = sphi 0, %s81
    %s103 = sphi 0, %s105
    %s106 = sphi 0, %s103
    %s107 = sphi 0, %s106
    %s123 = sphi 0, %s107
  $region4: #{conv2d_block.3} parent=0 // loop_header_branch
    %12 = sbr.rel (%p10) target = $region8
  $region5: #{conv2d_block.3} parent=0 // loop_body
    %s14 = ssub.s32 %s9, 1
    %s15 = ssub.s32 %s9, 2
    %s22 = sadd.s32 1, %s17
    %p23 = scmp.ge.s32.totalorder %s22, 2
    %s24 = scalar_select %p23, 0, %s22
    %s25 = sadd.s32 1, %s16
    %s26 = scalar_select %p23, %s25, %s16
    %p27 = scmp.ge.s32.totalorder %s26, 2
    %s28 = scalar_select %p27, 0, %s26
    %s29 = ssub.s32 %s16, %s28
    %s30 = ssub.s32 %s17, %s24
    %s31 = sor.u32 %s29, %s30
    %p32 = scmp.eq.s32.totalorder %s31, 0
    %s34 = sadd.s32 %s33, 1
    %s35 = scalar_select %p32, %s33, %s34
    %p38 = pneg %p32
    %p39 = scmp.eq.s32.totalorder %s9, 3
    %p40 = por %p38, %p39
    %p41 = scmp.ne.s32.totalorder %s33, %s36
    %p42 = scmp.eq.s32.totalorder %s9, 0
    %p43 = por %p41, %p42
    %p44 = scmp.ne.s32.totalorder %s33, %s36
    %p45 = scmp.eq.s32.totalorder %s14, 3
    %p46 = por %p44, %p45
    %p47 = scmp.ne.s32.totalorder %s36, %s37
    %p48 = scmp.eq.s32.totalorder %s14, 0
    %p49 = por %p47, %p48
    %p50 = scmp.ne.s32.totalorder %s36, %s37
    %p51 = scmp.eq.s32.totalorder %s15, 3
    %p52 = por %p50, %p51
    %p54 = scmp.ne.s32.totalorder %s37, %s53
    %p55 = scmp.eq.s32.totalorder %s15, 0
    %p56 = por %p54, %p55
    %s58 = sadd.s32 %s57, 1
    %p61 = scmp.eq.s32.totalorder %s9, 3
    %p62 = scmp.ne.s32.totalorder %s57, %s59
    %p63 = scmp.eq.s32.totalorder %s9, 0
    %p64 = por %p62, %p63
    %p65 = scmp.ne.s32.totalorder %s57, %s59
    %p66 = scmp.eq.s32.totalorder %s14, 3
    %p67 = por %p65, %p66
    %p68 = scmp.ne.s32.totalorder %s59, %s60
    %p69 = scmp.eq.s32.totalorder %s14, 0
    %p70 = por %p68, %p69
    %p71 = scmp.ne.s32.totalorder %s59, %s60
    %p72 = scmp.eq.s32.totalorder %s15, 3
    %p73 = por %p71, %p72
    %p75 = scmp.ne.s32.totalorder %s60, %s74
    %p76 = scmp.eq.s32.totalorder %s15, 0
    %p77 = por %p75, %p76
    %s79 = sadd.s32 %s78, 1
    %p82 = scmp.eq.s32.totalorder %s9, 3
    %p83 = scmp.ne.s32.totalorder %s78, %s80
    %p84 = scmp.eq.s32.totalorder %s9, 0
    %p85 = por %p83, %p84
    %p86 = scmp.ne.s32.totalorder %s78, %s80
    %p87 = scmp.eq.s32.totalorder %s14, 3
    %p88 = por %p86, %p87
    %p89 = scmp.ne.s32.totalorder %s80, %s81
    %p90 = scmp.eq.s32.totalorder %s14, 0
    %p91 = por %p89, %p90
    %p92 = scmp.ne.s32.totalorder %s80, %s81
    %p93 = scmp.eq.s32.totalorder %s15, 3
    %p94 = por %p92, %p93
    %p96 = scmp.ne.s32.totalorder %s81, %s95
    %p97 = scmp.eq.s32.totalorder %s15, 0
    %p98 = por %p96, %p97
    %s99 = ssub.s32 %s16, %s28
    %s100 = ssub.s32 %s17, %s24
    %s101 = sor.u32 %s99, %s100
    %p102 = scmp.eq.s32.totalorder %s101, 0
    %s104 = sadd.s32 %s103, 1
    %s105 = scalar_select %p102, %s103, %s104
    %p108 = pneg %p102
    %p109 = scmp.eq.s32.totalorder %s9, 3
    %p110 = por %p108, %p109
    %p111 = scmp.ne.s32.totalorder %s103, %s106
    %p112 = scmp.eq.s32.totalorder %s9, 0
    %p113 = por %p111, %p112
    %p114 = scmp.ne.s32.totalorder %s103, %s106
    %p115 = scmp.eq.s32.totalorder %s14, 3
    %p116 = por %p114, %p115
    %p117 = scmp.ne.s32.totalorder %s106, %s107
    %p118 = scmp.eq.s32.totalorder %s14, 0
    %p119 = por %p117, %p118
    %p120 = scmp.ne.s32.totalorder %s106, %s107
    %p121 = scmp.eq.s32.totalorder %s15, 3
    %p122 = por %p120, %p121
    %p124 = scmp.ne.s32.totalorder %s107, %s123
    %p125 = scmp.eq.s32.totalorder %s15, 0
    %p126 = por %p124, %p125
    %p127 = scmp.le.s32.totalorder 1, %s9
    %p128 = scmp.lt.s32.totalorder %s9, 5
    %p129 = pnand %p127, %p128
    %p130 = pneg %p129
    // Predicated region
    $region9: #{conv2d_block.3} parent=5 // pred_check
      _
    $region10: #{conv2d_block.3} parent=5 // pred_check_branch
      %132 = sbr.rel (%p129) target = $region12
    $region11: #{conv2d_block.3} parent=5 // pred_region
      %s133 = ssub.s32 %s9, 1
      // Predicated region
      $region13: #{conv2d_block.3} parent=11 // pred_check
        %p134 = pneg %p70
      $region14: #{conv2d_block.3} parent=11 // pred_check_branch
        %136 = sbr.rel (%p134) target = $region16
      $region15: #{conv2d_block.3} parent=11 // pred_region
        _
      $region16: #{conv2d_block.3} parent=11 // pred_fallthru
        _
      // Predicated region
      $region17: #{conv2d_block.3} parent=11 // pred_check
        %p137 = pneg %p91
      $region18: #{conv2d_block.3} parent=11 // pred_check_branch
        %139 = sbr.rel (%p137) target = $region20
      $region19: #{conv2d_block.3} parent=11 // pred_region
        _
      $region20: #{conv2d_block.3} parent=11 // pred_fallthru
        _
    $region12: #{conv2d_block.3} parent=5 // pred_fallthru
      _
    %p140 = scmp.lt.s32.totalorder %s9, 4
    // Predicated region
    $region21: #{conv2d_block.3} parent=5 // pred_check
      %p141 = pneg %p140
    $region22: #{conv2d_block.3} parent=5 // pred_check_branch
      %143 = sbr.rel (%p141) target = $region24
    $region23: #{conv2d_block.3} parent=5 // pred_region
      // Predicated region
      $region25: #{conv2d_block.3} parent=23 // pred_check
        %p144 = pneg %p43
      $region26: #{conv2d_block.3} parent=23 // pred_check_branch
        %146 = sbr.rel (%p144) target = $region28
      $region27: #{conv2d_block.3} parent=23 // pred_region
        %p147 = scmp.lt.s32.totalorder %s16, 1
        %s148 = scalar_select %p147, %s16, 1
        %p149 = scmp.lt.s32.totalorder %s17, 1
        %s150 = scalar_select %p149, %s17, 1
        %s151 = smul.addr %s148, 2
        %s152 = sadd.s32 %s150, %s151
        %s153 = smul.addr %s152, 4
        %s154 = scalar_lea.vmem %s0, %s153
      $region28: #{conv2d_block.3} parent=23 // pred_fallthru
        _
    $region24: #{conv2d_block.3} parent=5 // pred_fallthru
      _
    %p155 = scmp.le.s32.totalorder 1, %s9
    %p156 = scmp.lt.s32.totalorder %s9, 5
    %p157 = pnand %p155, %p156
    %p158 = pneg %p157
    // Predicated region
    $region29: #{conv2d_block.3} parent=5 // pred_check
      _
    $region30: #{conv2d_block.3} parent=5 // pred_check_branch
      %160 = sbr.rel (%p157) target = $region32
    $region31: #{conv2d_block.3} parent=5 // pred_region
      %s161 = ssub.s32 %s9, 1
      %p162 = scmp.lt.s32.totalorder %s18, 1
      %s163 = scalar_select %p162, %s18, 1
      %p164 = scmp.lt.s32.totalorder %s19, 1
      %s165 = scalar_select %p164, %s19, 1
      %s166 = smul.addr %s163, 2
      %s167 = sadd.s32 %s165, %s166
      %s168 = smul.addr %s167, 4
      %s169 = scalar_lea.vmem %s0, %s168
      %p170 = pneg %p49
      %p171 = pneg %p46
      %p172 = pneg %p70
      %p173 = pneg %p67
      %p174 = pneg %p91
      %p175 = pneg %p88
      %p176 = pneg %p119
      %p177 = pneg %p116
      %p178 = scmp.lt.s32.totalorder %s18, 1
      %s179 = scalar_select %p178, %s18, 1
      %p180 = scmp.lt.s32.totalorder %s19, 1
      %s181 = scalar_select %p180, %s19, 1
      %s182 = smul.addr %s179, 2
      %s183 = sadd.s32 %s181, %s182
      %s184 = smul.addr %s183, 8
      %s185 = scalar_lea.vmem %s3, %s184
      %p186 = scmp.lt.s32.totalorder %s18, 1
      %s187 = scalar_select %p186, %s18, 1
      %p188 = scmp.lt.s32.totalorder %s19, 1
      %s189 = scalar_select %p188, %s19, 1
      %s190 = smul.addr %s187, 2
      %s191 = sadd.s32 %s189, %s190
      %s192 = smul.addr %s191, 4
      %s193 = scalar_lea.vmem %s0, %s192
      %p194 = scmp.lt.s32.totalorder %s18, 1
      %s195 = scalar_select %p194, %s18, 1
      %p196 = scmp.lt.s32.totalorder %s19, 1
      %s197 = scalar_select %p196, %s19, 1
      %s198 = smul.addr %s195, 2
      %s199 = sadd.s32 %s197, %s198
      %s200 = smul.addr %s199, 8
      %s201 = scalar_lea.vmem %s3, %s200
      %v202 = vld [vmem:[%s193] sm:$0xf]
      %v203 = vunpack.c.l.bf16 %v202
      %v204 = vld [vmem:[%s1] sm:$0xff]
      %206 = vset.pattern.permute.xlu0 0
      %207 = vperm.xlu0 %206, %v204
      %v208 = vpop.permute.xlu0 %207
      %v210 = vmul.f32 %v203, %v208
      %v211 = vld [vmem:[%s2] sm:$0xff]
      %213 = vset.pattern.permute.xlu0 0
      %214 = vperm.xlu0 %213, %v211
      %v215 = vpop.permute.xlu0 %214
      %v217 = vadd.f32 %v210, %v215
      %v218 = vmax.f32 %v217, 0.0
      %219 = vst [vmem:[%s201] sm:$0xff] %v218
      %p220 = scmp.lt.s32.totalorder %s18, 1
      %s221 = scalar_select %p220, %s18, 1
      %p222 = scmp.lt.s32.totalorder %s19, 1
      %s223 = scalar_select %p222, %s19, 1
      %s224 = smul.addr %s221, 2
      %s225 = sadd.s32 %s223, %s224
      %s226 = smul.addr %s225, 8
      %s227 = scalar_lea.vmem %s3, %s226
      // Predicated region
      $region33: #{conv2d_block.3} parent=31 // pred_check
        %p228 = pneg %p116
      $region34: #{conv2d_block.3} parent=31 // pred_check_branch
        %230 = sbr.rel (%p228) target = $region36
      $region35: #{conv2d_block.3} parent=31 // pred_region
        _
      $region36: #{conv2d_block.3} parent=31 // pred_fallthru
        _
    $region32: #{conv2d_block.3} parent=5 // pred_fallthru
      _
    %p231 = scmp.le.s32.totalorder 2, %s9
    // Predicated region
    $region37: #{conv2d_block.3} parent=5 // pred_check
      %p232 = pneg %p231
    $region38: #{conv2d_block.3} parent=5 // pred_check_branch
      %234 = sbr.rel (%p232) target = $region40
    $region39: #{conv2d_block.3} parent=5 // pred_region
      %s235 = ssub.s32 %s9, 2
      // Predicated region
      $region41: #{conv2d_block.3} parent=39 // pred_check
        %p236 = pneg %p122
      $region42: #{conv2d_block.3} parent=39 // pred_check_branch
        %238 = sbr.rel (%p236) target = $region44
      $region43: #{conv2d_block.3} parent=39 // pred_region
        %p239 = scmp.lt.s32.totalorder %s20, 1
        %s240 = scalar_select %p239, %s20, 1
        %p241 = scmp.lt.s32.totalorder %s21, 1
        %s242 = scalar_select %p241, %s21, 1
        %s243 = smul.addr %s240, 2
        %s244 = sadd.s32 %s242, %s243
        %s245 = smul.addr %s244, 8
        %s246 = scalar_lea.vmem %s3, %s245
      $region44: #{conv2d_block.3} parent=39 // pred_fallthru
        _
    $region40: #{conv2d_block.3} parent=5 // pred_fallthru
      _
  $region6: #{conv2d_block.3} parent=0 // loop_footer
    %s13 = sadd.s32 1, %s9
  $region7: #{conv2d_block.3} parent=0 // loop_footer_branch
    %8 = sbr.rel target = $region3
  $region8: #{conv2d_block.3} parent=0 // loop_exit
    _

// kernel: conv2d_block.2
$region0: #{conv2d_block.2}
  #allocation0 [shape = 'u32[]', space=smem, size = 0x4, offset = 0x4, fixed_abs, tag = 'smem constant byte address 0x4 - core index']
  #allocation1 [shape = 'u32[72,128]{1,0:T(1,128)}', space=vmem, size = 0x9000, scoped, tag = 'internal scratch']
  %s0 = inlined_call_operand.vmem [shape: bf16[2,48,256], index: 0, kind: input, shape index: {}]
  %s1 = inlined_call_operand.vmem [shape: bf16[8,48], index: 1, kind: input, shape index: {}]
  %s2 = inlined_call_operand.vmem [shape: bf16[2,8,256], index: 2, kind: output, shape index: {0}]
  %s3 = inlined_call_operand.vmem [shape: f32[2,2,8,2], index: 3, kind: output, shape index: {1}]
  %4 = xla_tuple %s2, %s3
  %s5 = sld [smem:[#allocation0]]
  $region90: #{conv2d_block.2} parent=0
    _
  %s7 = ssub.s32 1, %s5
  %s8 = scalar_select 0, %s7, %s5
  $region1: #{conv2d_block.2} parent=0
    #allocation2 [shape = 'u8[24576]{0}', space=vmem, size = 0x6000, scoped, tag = 'input window, operand 0']
    loop: start=0, step=1, limit=6
    $region2: #{conv2d_block.2} parent=1 // loop_pre_header
      _
    $region3: #{conv2d_block.2} parent=1 // loop_header
      %s10 = sphi 0, %s14
      %p11 = scmp.ge.s32.totalorder %s10, 6
      %s17 = sphi 0, %s29
      %s18 = sphi 0, %s25
      %s19 = sphi 0, %s17
      %s20 = sphi 0, %s18
      %s21 = sphi 0, %s19
      %s22 = sphi 0, %s20
      %s34 = sphi 0, %s36
      %s37 = sphi 0, %s34
      %s38 = sphi 0, %s37
      %s54 = sphi 0, %s38
      %s58 = sphi 0, %s58
      %s60 = sphi 0, %s58
      %s61 = sphi 0, %s60
      %s75 = sphi 0, %s61
      %s83 = sphi 0, %s85
      %s86 = sphi 0, %s83
      %s87 = sphi 0, %s86
      %s103 = sphi 0, %s87
      %s111 = sphi 0, %s113
      %s114 = sphi 0, %s111
      %s115 = sphi 0, %s114
      %s131 = sphi 0, %s115
    $region4: #{conv2d_block.2} parent=1 // loop_header_branch
      %13 = sbr.rel (%p11) target = $region8
    $region5: #{conv2d_block.2} parent=1 // loop_body
      %s15 = ssub.s32 %s10, 1
      %s16 = ssub.s32 %s10, 2
      %s23 = sadd.s32 1, %s18
      %p24 = scmp.ge.s32.totalorder %s23, 2
      %s25 = scalar_select %p24, 0, %s23
      %s26 = sadd.s32 1, %s17
      %s27 = scalar_select %p24, %s26, %s17
      %p28 = scmp.ge.s32.totalorder %s27, 2
      %s29 = scalar_select %p28, 0, %s27
      %s30 = ssub.s32 %s17, %s29
      %s31 = ssub.s32 %s18, %s25
      %s32 = sor.u32 %s30, %s31
      %p33 = scmp.eq.s32.totalorder %s32, 0
      %s35 = sadd.s32 %s34, 1
      %s36 = scalar_select %p33, %s34, %s35
      %p39 = pneg %p33
      %p40 = scmp.eq.s32.totalorder %s10, 3
      %p41 = por %p39, %p40
      %p42 = scmp.ne.s32.totalorder %s34, %s37
      %p43 = scmp.eq.s32.totalorder %s10, 0
      %p44 = por %p42, %p43
      %p45 = scmp.ne.s32.totalorder %s34, %s37
      %p46 = scmp.eq.s32.totalorder %s15, 3
      %p47 = por %p45, %p46
      %p48 = scmp.ne.s32.totalorder %s37, %s38
      %p49 = scmp.eq.s32.totalorder %s15, 0
      %p50 = por %p48, %p49
      %p51 = scmp.ne.s32.totalorder %s37, %s38
      %p52 = scmp.eq.s32.totalorder %s16, 3
      %p53 = por %p51, %p52
      %p55 = scmp.ne.s32.totalorder %s38, %s54
      %p56 = scmp.eq.s32.totalorder %s16, 0
      %p57 = por %p55, %p56
      %s59 = sadd.s32 %s58, 1
      %p62 = scmp.eq.s32.totalorder %s10, 3
      %p63 = scmp.ne.s32.totalorder %s58, %s60
      %p64 = scmp.eq.s32.totalorder %s10, 0
      %p65 = por %p63, %p64
      %p66 = scmp.ne.s32.totalorder %s58, %s60
      %p67 = scmp.eq.s32.totalorder %s15, 3
      %p68 = por %p66, %p67
      %p69 = scmp.ne.s32.totalorder %s60, %s61
      %p70 = scmp.eq.s32.totalorder %s15, 0
      %p71 = por %p69, %p70
      %p72 = scmp.ne.s32.totalorder %s60, %s61
      %p73 = scmp.eq.s32.totalorder %s16, 3
      %p74 = por %p72, %p73
      %p76 = scmp.ne.s32.totalorder %s61, %s75
      %p77 = scmp.eq.s32.totalorder %s16, 0
      %p78 = por %p76, %p77
      %s79 = ssub.s32 %s17, %s29
      %s80 = ssub.s32 %s18, %s25
      %s81 = sor.u32 %s79, %s80
      %p82 = scmp.eq.s32.totalorder %s81, 0
      %s84 = sadd.s32 %s83, 1
      %s85 = scalar_select %p82, %s83, %s84
      %p88 = pneg %p82
      %p89 = scmp.eq.s32.totalorder %s10, 3
      %p90 = por %p88, %p89
      %p91 = scmp.ne.s32.totalorder %s83, %s86
      %p92 = scmp.eq.s32.totalorder %s10, 0
      %p93 = por %p91, %p92
      %p94 = scmp.ne.s32.totalorder %s83, %s86
      %p95 = scmp.eq.s32.totalorder %s15, 3
      %p96 = por %p94, %p95
      %p97 = scmp.ne.s32.totalorder %s86, %s87
      %p98 = scmp.eq.s32.totalorder %s15, 0
      %p99 = por %p97, %p98
      %p100 = scmp.ne.s32.totalorder %s86, %s87
      %p101 = scmp.eq.s32.totalorder %s16, 3
      %p102 = por %p100, %p101
      %p104 = scmp.ne.s32.totalorder %s87, %s103
      %p105 = scmp.eq.s32.totalorder %s16, 0
      %p106 = por %p104, %p105
      %s107 = ssub.s32 %s17, %s29
      %s108 = ssub.s32 %s18, %s25
      %s109 = sor.u32 %s107, %s108
      %p110 = scmp.eq.s32.totalorder %s109, 0
      %s112 = sadd.s32 %s111, 1
      %s113 = scalar_select %p110, %s111, %s112
      %p116 = pneg %p110
      %p117 = scmp.eq.s32.totalorder %s10, 3
      %p118 = por %p116, %p117
      %p119 = scmp.ne.s32.totalorder %s111, %s114
      %p120 = scmp.eq.s32.totalorder %s10, 0
      %p121 = por %p119, %p120
      %p122 = scmp.ne.s32.totalorder %s111, %s114
      %p123 = scmp.eq.s32.totalorder %s15, 3
      %p124 = por %p122, %p123
      %p125 = scmp.ne.s32.totalorder %s114, %s115
      %p126 = scmp.eq.s32.totalorder %s15, 0
      %p127 = por %p125, %p126
      %p128 = scmp.ne.s32.totalorder %s114, %s115
      %p129 = scmp.eq.s32.totalorder %s16, 3
      %p130 = por %p128, %p129
      %p132 = scmp.ne.s32.totalorder %s115, %s131
      %p133 = scmp.eq.s32.totalorder %s16, 0
      %p134 = por %p132, %p133
      %p135 = scmp.le.s32.totalorder 1, %s10
      %p136 = scmp.lt.s32.totalorder %s10, 5
      %p137 = pnand %p135, %p136
      %p138 = pneg %p137
      // Predicated region
      $region9: #{conv2d_block.2} parent=5 // pred_check
        _
      $region10: #{conv2d_block.2} parent=5 // pred_check_branch
        %140 = sbr.rel (%p137) target = $region12
      $region11: #{conv2d_block.2} parent=5 // pred_region
        %s141 = ssub.s32 %s10, 1
        // Predicated region
        $region13: #{conv2d_block.2} parent=11 // pred_check
          %p142 = pneg %p71
        $region14: #{conv2d_block.2} parent=11 // pred_check_branch
          %144 = sbr.rel (%p142) target = $region16
        $region15: #{conv2d_block.2} parent=11 // pred_region
          _
        $region16: #{conv2d_block.2} parent=11 // pred_fallthru
          _
      $region12: #{conv2d_block.2} parent=5 // pred_fallthru
        _
      %p145 = scmp.lt.s32.totalorder %s10, 4
      // Predicated region
      $region17: #{conv2d_block.2} parent=5 // pred_check
        %p146 = pneg %p145
      $region18: #{conv2d_block.2} parent=5 // pred_check_branch
        %148 = sbr.rel (%p146) target = $region20
      $region19: #{conv2d_block.2} parent=5 // pred_region
        // Predicated region
        $region21: #{conv2d_block.2} parent=19 // pred_check
          %p149 = pneg %p44
        $region22: #{conv2d_block.2} parent=19 // pred_check_branch
          %151 = sbr.rel (%p149) target = $region24
        $region23: #{conv2d_block.2} parent=19 // pred_region
          %s152 = sand.u32 %s34, 1
          %s153 = sand.u32 %s34, 1
          %s154 = smul.addr %s153, 24
          %s155 = scalar_lea.vmem [#allocation2], %s154
          %s156 = smul.addr %s17, 12
          %s157 = sadd.s32 %s18, %s156
          %s158 = smul.addr %s157, 4
          %s159 = scalar_lea.vmem %s0, %s158
          // Predicated region
          $region25: #{conv2d_block.2} parent=23 // pred_check
            _
          $region26: #{conv2d_block.2} parent=23 // pred_check_branch
            %161 = sbr.rel (0) target = $region28
          $region27: #{conv2d_block.2} parent=23 // pred_region
            // Predicated region
            $region29: #{conv2d_block.2} parent=27 // pred_check
              _
            $region30: #{conv2d_block.2} parent=27 // pred_check_branch
              %163 = sbr.rel target = $region32
            $region31: #{conv2d_block.2} parent=27 // pred_region
              // Predicated region
              $region44: #{conv2d_block.2} parent=31 // pred_check
                _
              $region45: #{conv2d_block.2} parent=31 // pred_check_branch
                %189 = sbr.rel (0) target = $region47
              $region46: #{conv2d_block.2} parent=31 // pred_region
                loop: start=0, step=1, limit=1
                $region48: #{conv2d_block.2} parent=46 // loop_pre_header
                  _
                $region49: #{conv2d_block.2} parent=46 // loop_header
                  %s191 = sphi 0, %s195
                  %p192 = scmp.ge.s32.totalorder %s191, 1
                  %s196 = sphi %s159, %s159
                  %s197 = sphi %s155, %s155
                $region50: #{conv2d_block.2} parent=46 // loop_header_branch
                  %194 = sbr.rel (%p192) target = $region54
                $region51: #{conv2d_block.2} parent=46 // loop_body
                  _
                $region52: #{conv2d_block.2} parent=46 // loop_footer
                  %s195 = sadd.s32 1, %s191
                $region53: #{conv2d_block.2} parent=46 // loop_footer_branch
                  %190 = sbr.rel target = $region49
                $region54: #{conv2d_block.2} parent=46 // loop_exit
                  _
                %s199 = ssub.s32 16, 1
                loop: start=0, step=1, limit=1
                $region55: #{conv2d_block.2} parent=46 // loop_pre_header
                  _
                $region56: #{conv2d_block.2} parent=46 // loop_header
                  %s201 = sphi 0, %s205
                  %p202 = scmp.ge.s32.totalorder %s201, 1
                  %s206 = sphi %s159, %s159
                  %s207 = sphi %s155, %s155
                $region57: #{conv2d_block.2} parent=46 // loop_header_branch
                  %204 = sbr.rel (%p202) target = $region61
                $region58: #{conv2d_block.2} parent=46 // loop_body
                  %v208 = vld [vmem:[%s206] sm:%s199]
                  %209 = vst [vmem:[%s207] sm:%s199] %v208
                  %v210 = vld [vmem:[%s206 + $0x8] sm:%s199]
                  %211 = vst [vmem:[%s207 + $0x4] sm:%s199] %v210
                  %v212 = vld [vmem:[%s206 + $0x10] sm:%s199]
                  %213 = vst [vmem:[%s207 + $0x8] sm:%s199] %v212
                  %v214 = vld [vmem:[%s206 + $0x18] sm:%s199]
                  %215 = vst [vmem:[%s207 + $0xc] sm:%s199] %v214
                  %v216 = vld [vmem:[%s206 + $0x20] sm:%s199]
                  %217 = vst [vmem:[%s207 + $0x10] sm:%s199] %v216
                  %v218 = vld [vmem:[%s206 + $0x28] sm:%s199]
                  %219 = vst [vmem:[%s207 + $0x14] sm:%s199] %v218
                $region59: #{conv2d_block.2} parent=46 // loop_footer
                  %s205 = sadd.s32 1, %s201
                $region60: #{conv2d_block.2} parent=46 // loop_footer_branch
                  %200 = sbr.rel target = $region56
                $region61: #{conv2d_block.2} parent=46 // loop_exit
                  _
              $region47: #{conv2d_block.2} parent=31 // pred_fallthru
                _
            $region32: #{conv2d_block.2} parent=27 // pred_fallthru
              _
            // Predicated region
            $region33: #{conv2d_block.2} parent=27 // pred_check
              _
            $region34: #{conv2d_block.2} parent=27 // pred_check_branch
              %165 = sbr.rel (0) target = $region36
            $region35: #{conv2d_block.2} parent=27 // pred_region
              %s167 = ssub.s32 16, 1
              loop: start=0, step=1, limit=1
              $region37: #{conv2d_block.2} parent=35 // loop_pre_header
                _
              $region38: #{conv2d_block.2} parent=35 // loop_header
                %s169 = sphi 0, %s173
                %p170 = scmp.ge.s32.totalorder %s169, 1
                %s174 = sphi %s159, %s159
                %s175 = sphi %s155, %s155
              $region39: #{conv2d_block.2} parent=35 // loop_header_branch
                %172 = sbr.rel (%p170) target = $region43
              $region40: #{conv2d_block.2} parent=35 // loop_body
                %v176 = vld [vmem:[%s174] sm:%s167]
                %177 = vst [vmem:[%s175] sm:%s167] %v176
                %v178 = vld [vmem:[%s174 + $0x8] sm:%s167]
                %179 = vst [vmem:[%s175 + $0x4] sm:%s167] %v178
                %v180 = vld [vmem:[%s174 + $0x10] sm:%s167]
                %181 = vst [vmem:[%s175 + $0x8] sm:%s167] %v180
                %v182 = vld [vmem:[%s174 + $0x18] sm:%s167]
                %183 = vst [vmem:[%s175 + $0xc] sm:%s167] %v182
                %v184 = vld [vmem:[%s174 + $0x20] sm:%s167]
                %185 = vst [vmem:[%s175 + $0x10] sm:%s167] %v184
                %v186 = vld [vmem:[%s174 + $0x28] sm:%s167]
                %187 = vst [vmem:[%s175 + $0x14] sm:%s167] %v186
              $region41: #{conv2d_block.2} parent=35 // loop_footer
                %s173 = sadd.s32 1, %s169
              $region42: #{conv2d_block.2} parent=35 // loop_footer_branch
                %168 = sbr.rel target = $region38
              $region43: #{conv2d_block.2} parent=35 // loop_exit
                _
            $region36: #{conv2d_block.2} parent=27 // pred_fallthru
              _
          $region28: #{conv2d_block.2} parent=23 // pred_fallthru
            _
          %220 = vnop
        $region24: #{conv2d_block.2} parent=19 // pred_fallthru
          _
      $region20: #{conv2d_block.2} parent=5 // pred_fallthru
        _
      %p221 = scmp.le.s32.totalorder 1, %s10
      %p222 = scmp.lt.s32.totalorder %s10, 5
      %p223 = pnand %p221, %p222
      %p224 = pneg %p223
      // Predicated region
      $region62: #{conv2d_block.2} parent=5 // pred_check
        _
      $region63: #{conv2d_block.2} parent=5 // pred_check_branch
        %226 = sbr.rel (%p223) target = $region65
      $region64: #{conv2d_block.2} parent=5 // pred_region
        %s227 = ssub.s32 %s10, 1
        %s228 = sand.u32 %s37, 1
        %s229 = sand.u32 %s37, 1
        %s230 = smul.addr %s229, 24
        %s231 = scalar_lea.vmem [#allocation2], %s230
        // Predicated region
        $region66: #{conv2d_block.2} parent=64 // pred_check
          %p232 = pneg %p50
        $region67: #{conv2d_block.2} parent=64 // pred_check_branch
          %234 = sbr.rel (%p232) target = $region69
        $region68: #{conv2d_block.2} parent=64 // pred_region
          _
        $region69: #{conv2d_block.2} parent=64 // pred_fallthru
          _
        %s235 = sand.u32 %s37, 1
        %s236 = sand.u32 %s37, 1
        %s237 = smul.addr %s236, 24
        %s238 = scalar_lea.vmem [#allocation2], %s237
        %p239 = pneg %p50
        %p240 = pneg %p47
        %p241 = pneg %p71
        %p242 = pneg %p68
        %p243 = pneg %p99
        %p244 = pneg %p96
        %p245 = scmp.lt.s32.totalorder %s19, 1
        %s246 = scalar_select %p245, %s19, 1
        %p247 = scmp.lt.s32.totalorder %s20, 1
        %s248 = scalar_select %p247, %s20, 1
        %s249 = smul.addr %s246, 2
        %s250 = sadd.s32 %s248, %s249
        %s251 = smul.addr %s250, 4
        %s252 = scalar_lea.vmem %s2, %s251
        %p253 = pneg %p127
        %p254 = pneg %p124
        %p255 = scmp.lt.s32.totalorder %s19, 1
        %s256 = scalar_select %p255, %s19, 1
        %p257 = scmp.lt.s32.totalorder %s20, 1
        %s258 = scalar_select %p257, %s20, 1
        %s259 = smul.addr %s256, 2
        %s260 = sadd.s32 %s258, %s259
        %s261 = smul.addr %s260, 8
        %s262 = scalar_lea.vmem %s3, %s261
        %p263 = scmp.lt.s32.totalorder %s19, 1
        %s264 = scalar_select %p263, %s19, 1
        %p265 = scmp.lt.s32.totalorder %s20, 1
        %s266 = scalar_select %p265, %s20, 1
        %s267 = smul.addr %s264, 2
        %s268 = sadd.s32 %s266, %s267
        %s269 = smul.addr %s268, 4
        %s270 = scalar_lea.vmem %s2, %s269
        %p271 = scmp.lt.s32.totalorder %s19, 1
        %s272 = scalar_select %p271, %s19, 1
        %p273 = scmp.lt.s32.totalorder %s20, 1
        %s274 = scalar_select %p273, %s20, 1
        %s275 = smul.addr %s272, 2
        %s276 = sadd.s32 %s274, %s275
        %s277 = smul.addr %s276, 8
        %s278 = scalar_lea.vmem %s3, %s277
        %v280 = vld [vmem:[%s1] sm:$0xf]
        %v281 = vld [vmem:[%s231] sm:$0xf]
        %v282 = vld [vmem:[%s231 + $0x4] sm:$0xf]
        %v283 = vld [vmem:[%s231 + $0x8] sm:$0xf]
        %v284 = vld [vmem:[%s231 + $0xc] sm:$0xf]
        %v285 = vld [vmem:[%s231 + $0x10] sm:$0xf]
        %v286 = vld [vmem:[%s231 + $0x14] sm:$0xf]
        %v293 = vunpack.c.l.b16 %v281
        %v294 = vunpack.c.l.b16 %v282
        %v295 = vunpack.c.l.b16 %v283
        %v296 = vunpack.c.l.b16 %v284
        %v297 = vunpack.c.l.b16 %v285
        %v298 = vunpack.c.l.b16 %v286
        %v299 = vpack.c.b16 %v294, %v293
        %v300 = vpack.c.b16 %v296, %v295
        %v301 = vpack.c.b16 %v298, %v297
        %vm305 = vcmask 392192
        %v307 = vsel %vm305, %v280, 0
        %309 = vmatpush.bf16.msra.mxu0 0
        %310 = vmatpush.bf16.msra.mxu0 0
        %311 = vmatpush.bf16.msra.mxu0 0
        %312 = vmatpush.bf16.msra.mxu0 0
        %313 = vmatpush.bf16.msra.mxu0 0
        %314 = vmatpush.bf16.msra.mxu0 %v301
        %315 = vmatpush.bf16.msra.mxu0 %v300
        %316 = vmatpush.bf16.msra.mxu0 %v299
        %317 = vmatmul.bf16.gmra.mxu0 %v307
        %v318 = vpop.f32.mrf.mxu0
        %v319 = vadd.f32 0.0, %v318
        %v320 = vpop.f32.mrf.mxu0
        %321 = vdwg.mxu0
        %v322 = vpack.c.bf16 %v319, %v319
        %323 = vst [vmem:[%s270] sm:$0xf] %v322
        %v324 = vlaneseq
        %v325 = vand.u32 %v324, 127
        %s326 = smul.u32 %s20, 128
        %v327 = vstv %s326
        %v328 = vadd.s32 %v325, %v327
        %vm329 = vcmp.lt.s32.totalorder %v328, 196
        %s330 = ssub.s32 196, %s326
        %p331 = scmp.lt.s32.totalorder %s330, 128
        %s332 = scalar_select %p331, %s330, 128
        %s333 = scvt.s32.f32 %s332
        %334 = vadd.xlane.f32.xlu0 %v319
        %v335 = vpop.xlane.xlu0 %334
        %v336 = vstv %s333
        %v337 = vrcp.pop %v336
        %v338 = vmul.f32 %v336, %v337
        %v339 = vsub.f32 1.0, %v338
        %v340 = vmul.f32 %v337, %v339
        %v341 = vadd.f32 %v337, %v340
        %vm342 = vweird.f32 %v336
        %vm343 = vweird.f32 %v337
        %vm344 = vmor %vm342, %vm343
        %v345 = vsel %vm344, %v337, %v341
        %v346 = vand.u32 2147483647, %v336
        %vm347 = vcmp.eq.f32.partialorder %v346, 8.507059e+37
        %v348 = vand.u32 %v336, 2147483648
        %v349 = vor.u32 1.1754944e-38, %v348
        %v350 = vsel %vm347, %v349, %v345
        %v351 = vmul.f32 %v335, %v350
        %v352 = vsub.f32 %v319, %v351
        %v353 = vsel %vm329, %v352, 0.0
        %vm354 = vcmask 7168
        %355 = vst.msk [vmem:[%s278] sm:$0xff] %vm354, %v335
        %v356 = vmul.f32 %v353, %v353
        %357 = vadd.xlane.f32.xlu0 %v356
        %v358 = vpop.xlane.xlu0 %357
        %vm359 = vcmask 15368
        %360 = vst.msk [vmem:[%s278] sm:$0xff] %vm359, %v358
        %p361 = scmp.lt.s32.totalorder %s19, 1
        %s362 = scalar_select %p361, %s19, 1
        %p363 = scmp.lt.s32.totalorder %s20, 1
        %s364 = scalar_select %p363, %s20, 1
        %s365 = smul.addr %s362, 2
        %s366 = sadd.s32 %s364, %s365
        %s367 = smul.addr %s366, 4
        %s368 = scalar_lea.vmem %s2, %s367
        %p369 = scmp.lt.s32.totalorder %s19, 1
        %s370 = scalar_select %p369, %s19, 1
        %p371 = scmp.lt.s32.totalorder %s20, 1
        %s372 = scalar_select %p371, %s20, 1
        %s373 = smul.addr %s370, 2
        %s374 = sadd.s32 %s372, %s373
        %s375 = smul.addr %s374, 8
        %s376 = scalar_lea.vmem %s3, %s375
        // Predicated region
        $region70: #{conv2d_block.2} parent=64 // pred_check
          %p377 = pneg %p96
        $region71: #{conv2d_block.2} parent=64 // pred_check_branch
          %379 = sbr.rel (%p377) target = $region73
        $region72: #{conv2d_block.2} parent=64 // pred_region
          _
        $region73: #{conv2d_block.2} parent=64 // pred_fallthru
          _
        // Predicated region
        $region74: #{conv2d_block.2} parent=64 // pred_check
          %p380 = pneg %p124
        $region75: #{conv2d_block.2} parent=64 // pred_check_branch
          %382 = sbr.rel (%p380) target = $region77
        $region76: #{conv2d_block.2} parent=64 // pred_region
          _
        $region77: #{conv2d_block.2} parent=64 // pred_fallthru
          _
      $region65: #{conv2d_block.2} parent=5 // pred_fallthru
        _
      %p383 = scmp.le.s32.totalorder 2, %s10
      // Predicated region
      $region78: #{conv2d_block.2} parent=5 // pred_check
        %p384 = pneg %p383
      $region79: #{conv2d_block.2} parent=5 // pred_check_branch
        %386 = sbr.rel (%p384) target = $region81
      $region80: #{conv2d_block.2} parent=5 // pred_region
        %s387 = ssub.s32 %s10, 2
        // Predicated region
        $region82: #{conv2d_block.2} parent=80 // pred_check
          %p388 = pneg %p102
        $region83: #{conv2d_block.2} parent=80 // pred_check_branch
          %390 = sbr.rel (%p388) target = $region85
        $region84: #{conv2d_block.2} parent=80 // pred_region
          %p391 = scmp.lt.s32.totalorder %s21, 1
          %s392 = scalar_select %p391, %s21, 1
          %p393 = scmp.lt.s32.totalorder %s22, 1
          %s394 = scalar_select %p393, %s22, 1
          %s395 = smul.addr %s392, 2
          %s396 = sadd.s32 %s394, %s395
          %s397 = smul.addr %s396, 4
          %s398 = scalar_lea.vmem %s2, %s397
        $region85: #{conv2d_block.2} parent=80 // pred_fallthru
          _
        // Predicated region
        $region86: #{conv2d_block.2} parent=80 // pred_check
          %p399 = pneg %p130
        $region87: #{conv2d_block.2} parent=80 // pred_check_branch
          %401 = sbr.rel (%p399) target = $region89
        $region88: #{conv2d_block.2} parent=80 // pred_region
          %p402 = scmp.lt.s32.totalorder %s21, 1
          %s403 = scalar_select %p402, %s21, 1
          %p404 = scmp.lt.s32.totalorder %s22, 1
          %s405 = scalar_select %p404, %s22, 1
          %s406 = smul.addr %s403, 2
          %s407 = sadd.s32 %s405, %s406
          %s408 = smul.addr %s407, 8
          %s409 = scalar_lea.vmem %s3, %s408
        $region89: #{conv2d_block.2} parent=80 // pred_fallthru
          _
      $region81: #{conv2d_block.2} parent=5 // pred_fallthru
        _
    $region6: #{conv2d_block.2} parent=1 // loop_footer
      %s14 = sadd.s32 1, %s10
    $region7: #{conv2d_block.2} parent=1 // loop_footer_branch
      %9 = sbr.rel target = $region3
    $region8: #{conv2d_block.2} parent=1 // loop_exit
      _

</llo_original>
